<compile_context>
chip_gen: v7x
topology: tpu7x:2x2x1
jax: 0.10.0
libtpu: 0.0.40
codegen_flags: <defaults>
</compile_context>

<pallas_src>
import functools

import jax
import jax.numpy as jnp
from jax.experimental import pallas as pl
from jax.experimental.pallas import tpu as pltpu

GAMMA = 2.0
ALPHA = 0.75

_LANES = 128
_MAX_BLOCK_ROWS = 2048  # (2048,128) f32 x 2 streams x 2 buffers = 4 MiB VMEM


def _focal_terms(x, t, gamma, alpha):
    """Elementwise focal loss terms (x = logits, t = targets), all in f32."""
    # Numerically stable BCE-with-logits: max(x,0) - x*t + log1p(exp(-|x|))
    # (identical to the PyTorch max_val formulation).
    bce = jnp.maximum(x, 0.0) - x * t + jnp.log1p(jnp.exp(-jnp.abs(x)))
    # invprobs = logsigmoid(-x * (2t - 1)), stable form (safe for soft targets).
    z = -x * (t * 2.0 - 1.0)
    invprobs = jnp.minimum(z, 0.0) - jnp.log1p(jnp.exp(-jnp.abs(z)))
    return alpha * jnp.exp(invprobs * gamma) * bce


def _focal_sum_kernel(o_ref, t_ref, out_ref, *, gamma, alpha, block_rows,
                      steps, total_rows, needs_mask):
    i = pl.program_id(0)   # "parallel" split axis (megacore on v7x)
    j = pl.program_id(1)   # "arbitrary" reduction axis

    x = o_ref[...].astype(jnp.float32)
    t = t_ref[...].astype(jnp.float32)
    loss = _focal_terms(x, t, gamma, alpha)

    if needs_mask:
        # Mask rows past the true extent (partial last block / duplicated
        # clamped blocks).  jnp.where so garbage pad values (NaN/Inf) never
        # leak into the sum.
        base = (i * steps + j) * block_rows
        row_id = base + jax.lax.broadcasted_iota(jnp.int32, loss.shape, 0)
        loss = jnp.where(row_id < total_rows, loss, 0.0)

    @pl.when(j == 0)
    def _():
        out_ref[...] = jnp.zeros_like(out_ref)

    # Keep partials lane-dense; the cross-lane reduce happens once, in the wrapper.
    out_ref[0:1, :] += jnp.sum(loss, axis=0, keepdims=True)


def focal_loss(outputs, targets, *, gamma=GAMMA, alpha=ALPHA):
    """Mean focal loss over all elements (matches TorchFocalLoss.forward)."""
    assert outputs.shape == targets.shape
    n = outputs.size
    gamma = float(gamma)
    alpha = float(alpha)

    o_flat = outputs.reshape(-1)
    t_flat = targets.reshape(-1)

    rows = n // _LANES
    n_main = rows * _LANES

    total = jnp.zeros((), jnp.float32)

    if rows > 0:
        o2 = o_flat[:n_main].reshape(rows, _LANES)
        t2 = t_flat[:n_main].reshape(rows, _LANES)

        block_rows = rows if rows <= _MAX_BLOCK_ROWS else _MAX_BLOCK_ROWS
        total_blocks = pl.cdiv(rows, block_rows)
        split = 2 if total_blocks >= 2 else 1          # dual-TC split (v7x)
        steps = pl.cdiv(total_blocks, split)
        needs_mask = (split * steps * block_rows) != rows
        last_block = total_blocks - 1

        kernel = functools.partial(
            _focal_sum_kernel, gamma=gamma, alpha=alpha,
            block_rows=block_rows, steps=steps, total_rows=rows,
            needs_mask=needs_mask)

        # Clamp the block index so padded grid steps never DMA fully out of
        # bounds; their contribution is zeroed by the in-kernel row mask.
        in_spec = pl.BlockSpec(
            (block_rows, _LANES),
            lambda i, j: (jnp.minimum(i * steps + j, last_block), 0))

        partials = pl.pallas_call(
            kernel,
            out_shape=jax.ShapeDtypeStruct((split * 8, _LANES), jnp.float32),
            grid_spec=pltpu.PrefetchScalarGridSpec(
                num_scalar_prefetch=0,
                grid=(split, steps),
                in_specs=[in_spec, in_spec],
                out_specs=pl.BlockSpec((8, _LANES), lambda i, j: (i, 0)),
            ),
            compiler_params=pltpu.CompilerParams(
                dimension_semantics=("parallel", "arbitrary")),
        )(o2, t2)

        total = total + jnp.sum(partials)

    if n_main < n:
        # <128-element ragged tail: reduce with plain jnp (negligible cost).
        xo = o_flat[n_main:].astype(jnp.float32)
        xt = t_flat[n_main:].astype(jnp.float32)
        total = total + jnp.sum(_focal_terms(xo, xt, gamma, alpha))

    return (total / jnp.float32(n)).astype(jnp.float32)


def _reference(outputs, targets, gamma=GAMMA, alpha=ALPHA):
    x = outputs.astype(jnp.float32)
    t = targets.astype(jnp.float32)
    max_val = jnp.maximum(-x, 0.0)
    log_ = jnp.log(jnp.exp(-max_val) + jnp.exp(-x - max_val))
    loss = x - x * t + max_val + log_
    invprobs = jax.nn.log_sigmoid(-x * (t * 2.0 - 1.0))
    loss = alpha * jnp.exp(invprobs * gamma) * loss
    return jnp.mean(loss)


if __name__ == "__main__":
    key = jax.random.PRNGKey(0)
    k1, k2, k3, k4 = jax.random.split(key, 4)

    # Primary small NCHW example (segmentation-style focal loss).
    shape = (2, 4, 16, 16)
    outputs = jax.random.normal(k1, shape, dtype=jnp.float32)
    targets = (jax.random.uniform(k2, shape) > 0.5).astype(jnp.float32)

    result = focal_loss(outputs, targets)
    jax.block_until_ready(result)
    ref = _reference(outputs, targets)
    assert jnp.allclose(result, ref, atol=1e-6, rtol=1e-4), (result, ref)

    # Ragged / multi-block case: exercises the partial-block mask, the
    # megacore split axis, the clamped index map and the <128-element tail.
    n_odd = 4196 * _LANES + 57
    o_big = jax.random.normal(k3, (n_odd,), dtype=jnp.float32)
    t_big = (jax.random.uniform(k4, (n_odd,)) > 0.5).astype(jnp.float32)

    result2 = focal_loss(o_big, t_big)
    jax.block_until_ready(result2)
    ref2 = _reference(o_big, t_big)
    assert jnp.allclose(result2, ref2, atol=1e-6, rtol=1e-4), (result2, ref2)

    print("KERNEL_OK")
</pallas_src>

<mosaic_0001>
module attributes {stable_mosaic.version = 11 : i64} {
  func.func @_focal_sum_kernel(%arg0: i32, %arg1: i32, %arg2: memref<16x128xf32, #tpu.memory_space<vmem>>, %arg3: memref<16x128xf32, #tpu.memory_space<vmem>>, %arg4: memref<8x128xf32, #tpu.memory_space<vmem>>) attributes {dimension_semantics = [#tpu.dimension_semantics<parallel>, #tpu.dimension_semantics<arbitrary>], iteration_bounds = array<i64: 1, 1>, scalar_prefetch = 0 : i64, scratch_operands = 0 : i64, tpu.core_type = #tpu.core_type<tc>, window_params = [{transform_indices = @transform_0, window_bounds = array<i64: 16, 128>}, {transform_indices = @transform_1, window_bounds = array<i64: 16, 128>}, {transform_indices = @transform_2, window_bounds = array<i64: 8, 128>}]} {
    %c0 = arith.constant 0 : index
    %c0_0 = arith.constant 0 : index
    %0 = vector.load %arg2[%c0, %c0_0] : memref<16x128xf32, #tpu.memory_space<vmem>>, vector<16x128xf32>
    %c0_1 = arith.constant 0 : index
    %c0_2 = arith.constant 0 : index
    %1 = vector.load %arg3[%c0_1, %c0_2] : memref<16x128xf32, #tpu.memory_space<vmem>>, vector<16x128xf32>
    %cst = arith.constant 0.000000e+00 : f32
    %2 = vector.broadcast %cst : f32 to vector<16x128xf32>
    %3 = arith.maximumf %0, %2 : vector<16x128xf32>
    %4 = arith.mulf %0, %1 : vector<16x128xf32>
    %5 = arith.subf %3, %4 : vector<16x128xf32>
    %6 = math.absf %0 : vector<16x128xf32>
    %cst_3 = arith.constant 0.000000e+00 : f32
    %7 = vector.broadcast %cst_3 : f32 to vector<16x128xf32>
    %8 = arith.subf %7, %6 : vector<16x128xf32>
    %9 = math.exp %8 : vector<16x128xf32>
    %10 = math.log1p %9 : vector<16x128xf32>
    %11 = arith.addf %5, %10 : vector<16x128xf32>
    %cst_4 = arith.constant 0.000000e+00 : f32
    %12 = vector.broadcast %cst_4 : f32 to vector<16x128xf32>
    %13 = arith.subf %12, %0 : vector<16x128xf32>
    %cst_5 = arith.constant 2.000000e+00 : f32
    %14 = vector.broadcast %cst_5 : f32 to vector<16x128xf32>
    %15 = arith.mulf %1, %14 : vector<16x128xf32>
    %cst_6 = arith.constant 1.000000e+00 : f32
    %16 = vector.broadcast %cst_6 : f32 to vector<16x128xf32>
    %17 = arith.subf %15, %16 : vector<16x128xf32>
    %18 = arith.mulf %13, %17 : vector<16x128xf32>
    %cst_7 = arith.constant 0.000000e+00 : f32
    %19 = vector.broadcast %cst_7 : f32 to vector<16x128xf32>
    %20 = arith.minimumf %18, %19 : vector<16x128xf32>
    %21 = math.absf %18 : vector<16x128xf32>
    %cst_8 = arith.constant 0.000000e+00 : f32
    %22 = vector.broadcast %cst_8 : f32 to vector<16x128xf32>
    %23 = arith.subf %22, %21 : vector<16x128xf32>
    %24 = math.exp %23 : vector<16x128xf32>
    %25 = math.log1p %24 : vector<16x128xf32>
    %26 = arith.subf %20, %25 : vector<16x128xf32>
    %cst_9 = arith.constant 2.000000e+00 : f32
    %27 = vector.broadcast %cst_9 : f32 to vector<16x128xf32>
    %28 = arith.mulf %26, %27 : vector<16x128xf32>
    %29 = math.exp %28 : vector<16x128xf32>
    %cst_10 = arith.constant 7.500000e-01 : f32
    %30 = vector.broadcast %cst_10 : f32 to vector<16x128xf32>
    %31 = arith.mulf %30, %29 : vector<16x128xf32>
    %32 = arith.mulf %31, %11 : vector<16x128xf32>
    %c0_i32 = arith.constant 0 : i32
    %33 = arith.cmpi eq, %arg1, %c0_i32 : i32
    %34 = arith.extui %33 : i1 to i32
    %c0_i32_11 = arith.constant 0 : i32
    %35 = arith.cmpi ne, %34, %c0_i32_11 : i32
    scf.if %35 {
      %cst_17 = arith.constant 0.000000e+00 : f32
      %41 = vector.broadcast %cst_17 : f32 to vector<8x128xf32>
      %c0_18 = arith.constant 0 : index
      %c0_19 = arith.constant 0 : index
      %42 = vector.load %arg4[%c0_18, %c0_19] : memref<8x128xf32, #tpu.memory_space<vmem>>, vector<8x128xf32>
      tpu.vector_store %arg4[%c0_18, %c0_19], %41 {strides = array<i32>} : memref<8x128xf32, #tpu.memory_space<vmem>>, vector<8x128xf32>,
    } else {
    }
    %c0_12 = arith.constant 0 : index
    %c0_13 = arith.constant 0 : index
    %36 = vector.load %arg4[%c0_12, %c0_13] : memref<8x128xf32, #tpu.memory_space<vmem>>, vector<1x128xf32>
    %cst_14 = arith.constant dense<0.000000e+00> : vector<128xf32>
    %37 = vector.multi_reduction <add>, %32, %cst_14 [0] : vector<16x128xf32> to vector<128xf32>
    %38 = vector.shape_cast %37 : vector<128xf32> to vector<1x128xf32>
    %39 = arith.addf %36, %38 : vector<1x128xf32>
    %c0_15 = arith.constant 0 : index
    %c0_16 = arith.constant 0 : index
    %40 = vector.load %arg4[%c0_15, %c0_16] : memref<8x128xf32, #tpu.memory_space<vmem>>, vector<1x128xf32>
    tpu.vector_store %arg4[%c0_15, %c0_16], %39 {strides = array<i32>} : memref<8x128xf32, #tpu.memory_space<vmem>>, vector<1x128xf32>,
    return
  }
  func.func @transform_0(%arg0: i32, %arg1: i32) -> (i32, i32) {
    %c1_i32 = arith.constant 1 : i32
    %0 = arith.muli %arg0, %c1_i32 : i32
    %1 = arith.addi %0, %arg1 : i32
    %c0_i32 = arith.constant 0 : i32
    %2 = arith.minsi %1, %c0_i32 : i32
    %c0_i32_0 = arith.constant 0 : i32
    %c0_i32_1 = arith.constant 0 : i32
    return %2, %c0_i32_0 : i32, i32
  }
  func.func @transform_1(%arg0: i32, %arg1: i32) -> (i32, i32) {
    %c1_i32 = arith.constant 1 : i32
    %0 = arith.muli %arg0, %c1_i32 : i32
    %1 = arith.addi %0, %arg1 : i32
    %c0_i32 = arith.constant 0 : i32
    %2 = arith.minsi %1, %c0_i32 : i32
    %c0_i32_0 = arith.constant 0 : i32
    %c0_i32_1 = arith.constant 0 : i32
    return %2, %c0_i32_0 : i32, i32
  }
  func.func @transform_2(%arg0: i32, %arg1: i32) -> (i32, i32) {
    %c0_i32 = arith.constant 0 : i32
    %c0_i32_0 = arith.constant 0 : i32
    return %arg0, %c0_i32 : i32, i32
  }
}

</mosaic_0001>

<llo_original>
// kernel: tpu_custom_call.1
$region0: #{tpu_custom_call.1}
  #allocation0 [shape = 'u32[]', space=smem, size = 0x4, offset = 0x4, fixed_abs, tag = 'smem constant byte address 0x4 - core index']
  #allocation1 [shape = 'u32[144,128]{1,0:T(1,128)}', space=vmem, size = 0x12000, scoped, tag = 'internal scratch']
  %s0 = inlined_call_operand.hbm [shape: f32[16,128], index: 0, kind: input, shape index: {}]
  %s1 = inlined_call_operand.hbm [shape: f32[16,128], index: 1, kind: input, shape index: {}]
  %s2 = inlined_call_operand.hbm [shape: f32[8,128], index: 2, kind: output, shape index: {}]
  %s3 = sld [smem:[#allocation0]]
  $region30: #{tpu_custom_call.1} parent=0
    _
  %s5 = ssub.s32 1, %s3
  %s6 = scalar_select 0, %s5, %s3
  $region1: #{tpu_custom_call.1} parent=0
    #allocation2 [shape = 'u8[8192]{0}', space=vmem, size = 0x2000, scoped, tag = 'input window, operand 0, single buffered']
    #allocation3 [shape = 's32[1]{0}', space=sflag, size = 0x4, scoped, tag = 'scoped memory for tpu_custom_call.1']
    #allocation4 [shape = 's32[1]{0}', space=sflag, size = 0x4, scoped, tag = 'scoped memory for tpu_custom_call.1']
    #allocation5 [shape = 'u8[8192]{0}', space=vmem, size = 0x2000, scoped, tag = 'input window, operand 1, single buffered']
    #allocation6 [shape = 's32[1]{0}', space=sflag, size = 0x4, scoped, tag = 'scoped memory for tpu_custom_call.1']
    #allocation7 [shape = 'u8[4096]{0}', space=vmem, size = 0x1000, scoped, tag = 'output window, operand 0, single buffered']
    %7 = vsyncpa [#allocation3], 0
    %8 = vsyncpa [#allocation6], 0
    %9 = vsyncpa [#allocation4], 0
    // Predicated region
    $region2: #{tpu_custom_call.1} parent=1 // pred_check
      _
    $region3: #{tpu_custom_call.1} parent=1 // pred_check_branch
      %11 = sbr.rel (0) target = $region5
    $region4: #{tpu_custom_call.1} parent=1 // pred_region
      %s12 = sadd.s32 0, 0
      %p13 = scmp.lt.s32.totalorder %s12, 0
      %s14 = scalar_select %p13, %s12, 0
      %s15 = smul.u32 2, %s14
      %s17 = ssub.s32 256, 256
      %18 = vsyncadd [#allocation3], %s17
      %s19 = smul.addr %s15, 128
      %s20 = scalar_lea.hbm %s0, %s19
      %s21 = sshll.u32 [#allocation2], 4
      %s22 = int_to_ptr.vmem [resolvable:$true] %s21
      %27 = dma.hbm_to_vmem [thread:$0]  %s20, 256, %s22, [#allocation3], 128, 128, 8
    $region5: #{tpu_custom_call.1} parent=1 // pred_fallthru
      _
    // Predicated region
    $region6: #{tpu_custom_call.1} parent=1 // pred_check
      _
    $region7: #{tpu_custom_call.1} parent=1 // pred_check_branch
      %29 = sbr.rel (0) target = $region9
    $region8: #{tpu_custom_call.1} parent=1 // pred_region
      %s30 = sadd.s32 0, 0
      %p31 = scmp.lt.s32.totalorder %s30, 0
      %s32 = scalar_select %p31, %s30, 0
      %s33 = smul.u32 2, %s32
      %s35 = ssub.s32 256, 256
      %36 = vsyncadd [#allocation6], %s35
      %s37 = smul.addr %s33, 128
      %s38 = scalar_lea.hbm %s1, %s37
      %s39 = sshll.u32 [#allocation5], 4
      %s40 = int_to_ptr.vmem [resolvable:$true] %s39
      %45 = dma.hbm_to_vmem [thread:$0]  %s38, 256, %s40, [#allocation6], 128, 128, 8
    $region9: #{tpu_custom_call.1} parent=1 // pred_fallthru
      _
    // Predicated region
    $region10: #{tpu_custom_call.1} parent=1 // pred_check
      _
    $region11: #{tpu_custom_call.1} parent=1 // pred_check_branch
      %47 = sbr.rel (0) target = $region13
    $region12: #{tpu_custom_call.1} parent=1 // pred_region
      %48 = dma.done [#allocation3], 256
    $region13: #{tpu_custom_call.1} parent=1 // pred_fallthru
      _
    // Predicated region
    $region14: #{tpu_custom_call.1} parent=1 // pred_check
      _
    $region15: #{tpu_custom_call.1} parent=1 // pred_check_branch
      %50 = sbr.rel (0) target = $region17
    $region16: #{tpu_custom_call.1} parent=1 // pred_region
      %51 = dma.done [#allocation6], 256
    $region17: #{tpu_custom_call.1} parent=1 // pred_fallthru
      _
    %s52 = sadd.s32 0, 0
    %p53 = scmp.lt.s32.totalorder %s52, 0
    %s54 = scalar_select %p53, %s52, 0
    %s55 = smul.u32 2, %s54
    %s56 = sadd.s32 0, 0
    %p57 = scmp.lt.s32.totalorder %s56, 0
    %s58 = scalar_select %p57, %s56, 0
    %s59 = smul.u32 2, %s58
    %v60 = vld [vmem:[#allocation2] sm:$0xff]
    %v61 = vld [vmem:[#allocation2 + $0x8] sm:$0xff]
    %v62 = vld [vmem:[#allocation5] sm:$0xff]
    %v63 = vld [vmem:[#allocation5 + $0x8] sm:$0xff]
    %v64 = vmax.f32 %v60, 0.0
    %v65 = vmax.f32 %v61, 0.0
    %v66 = vmul.f32 %v60, %v62
    %v67 = vmul.f32 %v61, %v63
    %v68 = vsub.f32 %v64, %v66
    %v69 = vsub.f32 %v65, %v67
    %v70 = vand.u32 2147483647, %v60
    %v71 = vand.u32 2147483647, %v61
    %v72 = vsub.f32 0.0, %v70
    %v73 = vsub.f32 0.0, %v71
    %v74 = vmul.f32 %v72, 1.442695
    %v75 = vpow.pop %v74
    %v76 = vmul.f32 %v73, 1.442695
    %v77 = vpow.pop %v76
    %v78 = vadd.f32 %v75, 1.0
    %v79 = vlog2.pop %v78
    %v80 = vmul.f32 %v79, 0.6931472
    %v81 = vmul.f32 -0.5, %v75
    %v82 = vadd.f32 %v81, 1.0
    %v83 = vmul.f32 %v82, %v75
    %v84 = vand.u32 2147483647, %v75
    %vm85 = vcmp.lt.f32.partialorder %v84, 0.0004427343
    %v86 = vsel %vm85, %v83, %v80
    %v87 = vadd.f32 %v77, 1.0
    %v88 = vlog2.pop %v87
    %v89 = vmul.f32 %v88, 0.6931472
    %v90 = vmul.f32 -0.5, %v77
    %v91 = vadd.f32 %v90, 1.0
    %v92 = vmul.f32 %v91, %v77
    %v93 = vand.u32 2147483647, %v77
    %vm94 = vcmp.lt.f32.partialorder %v93, 0.0004427343
    %v95 = vsel %vm94, %v92, %v89
    %v96 = vadd.f32 %v68, %v86
    %v97 = vadd.f32 %v69, %v95
    %v98 = vsub.f32 0.0, %v60
    %v99 = vsub.f32 0.0, %v61
    %v100 = vmul.f32 %v62, 2.0
    %v101 = vmul.f32 %v63, 2.0
    %v102 = vsub.f32 %v100, 1.0
    %v103 = vsub.f32 %v101, 1.0
    %v104 = vmul.f32 %v98, %v102
    %v105 = vmul.f32 %v99, %v103
    %v106 = vmin.f32 %v104, 0.0
    %v107 = vmin.f32 %v105, 0.0
    %v108 = vand.u32 2147483647, %v104
    %v109 = vand.u32 2147483647, %v105
    %v110 = vsub.f32 0.0, %v108
    %v111 = vsub.f32 0.0, %v109
    %v112 = vmul.f32 %v110, 1.442695
    %v113 = vpow.pop %v112
    %v114 = vmul.f32 %v111, 1.442695
    %v115 = vpow.pop %v114
    %v116 = vadd.f32 %v113, 1.0
    %v117 = vlog2.pop %v116
    %v118 = vmul.f32 %v117, 0.6931472
    %v119 = vmul.f32 -0.5, %v113
    %v120 = vadd.f32 %v119, 1.0
    %v121 = vmul.f32 %v120, %v113
    %v122 = vand.u32 2147483647, %v113
    %vm123 = vcmp.lt.f32.partialorder %v122, 0.0004427343
    %v124 = vsel %vm123, %v121, %v118
    %v125 = vadd.f32 %v115, 1.0
    %v126 = vlog2.pop %v125
    %v127 = vmul.f32 %v126, 0.6931472
    %v128 = vmul.f32 -0.5, %v115
    %v129 = vadd.f32 %v128, 1.0
    %v130 = vmul.f32 %v129, %v115
    %v131 = vand.u32 2147483647, %v115
    %vm132 = vcmp.lt.f32.partialorder %v131, 0.0004427343
    %v133 = vsel %vm132, %v130, %v127
    %v134 = vsub.f32 %v106, %v124
    %v135 = vsub.f32 %v107, %v133
    %v136 = vmul.f32 %v134, 2.0
    %v137 = vmul.f32 %v135, 2.0
    %v138 = vmul.f32 %v136, 1.442695
    %v139 = vpow.pop %v138
    %v140 = vmul.f32 %v137, 1.442695
    %v141 = vpow.pop %v140
    %v142 = vmul.f32 %v139, 0.75
    %v143 = vmul.f32 %v141, 0.75
    %v144 = vmul.f32 %v142, %v96
    %v145 = vmul.f32 %v143, %v97
    %p146 = scmp.eq.s32.totalorder 0, 0
    // Predicated region
    $region18: #{tpu_custom_call.1} parent=1 // pred_check
      %p147 = pneg %p146
    $region19: #{tpu_custom_call.1} parent=1 // pred_check_branch
      %149 = sbr.rel (%p147) target = $region21
    $region20: #{tpu_custom_call.1} parent=1 // pred_region
      %150 = vst [vmem:[#allocation7] sm:$0xff] 0.0
    $region21: #{tpu_custom_call.1} parent=1 // pred_fallthru
      _
    %v151 = vld [vmem:[#allocation7] sm:$0x1]
    %v152 = vadd.f32 %v144, %v145
    %v153 = vrot.slane %v152, 4
    %v154 = vadd.f32 %v152, %v153
    %v155 = vrot.slane %v154, 2
    %v156 = vadd.f32 %v154, %v155
    %v157 = vrot.slane %v156, 1
    %v158 = vadd.f32 %v156, %v157
    %v159 = vadd.f32 %v151, %v158
    %160 = vst [vmem:[#allocation7] sm:$0x1] %v159
    // Predicated region
    $region22: #{tpu_custom_call.1} parent=1 // pred_check
      _
    $region23: #{tpu_custom_call.1} parent=1 // pred_check_branch
      %162 = sbr.rel (0) target = $region25
    $region24: #{tpu_custom_call.1} parent=1 // pred_region
      %s164 = ssub.s32 128, 128
      %165 = vsyncadd [#allocation4], %s164
      %s167 = sshll.u32 [#allocation7], 4
      %s168 = int_to_ptr.vmem [resolvable:$true] %s167
      %170 = dma.vmem_to_hbm [thread:$0]  %s168, 128, %s2, [#allocation4]
    $region25: #{tpu_custom_call.1} parent=1 // pred_fallthru
      _
    // Predicated region
    $region26: #{tpu_custom_call.1} parent=1 // pred_check
      _
    $region27: #{tpu_custom_call.1} parent=1 // pred_check_branch
      %172 = sbr.rel (0) target = $region29
    $region28: #{tpu_custom_call.1} parent=1 // pred_region
      %173 = dma.done [#allocation4], 128
    $region29: #{tpu_custom_call.1} parent=1 // pred_fallthru
      _
    %174 = vsyncpa [#allocation3], 1
    %175 = vsyncpa [#allocation6], 1
    %176 = vsyncpa [#allocation4], 1

</llo_original>
